<compile_context>
chip_gen: v7x
topology: tpu7x:2x2x1
jax: 0.10.0
libtpu: 0.0.40
codegen_flags: <defaults>
</compile_context>

<pallas_src>
import jax
import jax.numpy as jnp
from jax.experimental import pallas as pl
from jax.experimental.pallas import tpu as pltpu

_LANE = 128
_TARGET_TILE_BYTES = 2 * 1024 * 1024   # ~2 MiB/block -> 4x under double-buffering
_VMEM_LIMIT_BYTES = 32 * 1024 * 1024   # <= physical VMEM on v5e/v6e/v7x


def _square_kernel(x_ref, o_ref):
    x = x_ref[...]
    o_ref[...] = x * x  # torch.pow(t, 2) == t * t (exact, pure VPU, no EUP)


def _sublane_min(dtype) -> int:
    # f32 -> 8, bf16 -> 16, int8/fp8 -> 32 (sub-32-bit packs along sublanes).
    return max(8, 32 // jnp.dtype(dtype).itemsize)


def _pick_layout(n: int, sublane: int):
    """Pick a lane-dense (rows, cols) slab for n elements.

    Prefers wide cols (large multiple of 128) with no padding and rows aligned
    to the sublane minimum; falls back to minimal zero padding only when the
    flattened size does not factor cleanly.  Returns (rows, cols, padded_n).
    """
    widths = (8192, 4096, 2048, 1024, 512, 256, 128)
    for c in widths:               # aligned rows, no padding (preferred)
        if n % c == 0 and (n // c) % sublane == 0:
            return n // c, c, n
    for c in widths:               # ragged rows, still no padding
        if n % c == 0:
            return n // c, c, n
    c = 1024 if n >= 1024 else _LANE
    unit = sublane * c
    n_pad = pl.cdiv(n, unit) * unit
    return n_pad // c, c, n_pad


def _pick_block_rows(rows: int, cols: int, itemsize: int, sublane: int) -> int:
    row_bytes = cols * itemsize
    br = max(1, _TARGET_TILE_BYTES // row_bytes)
    br = max(sublane, (br // sublane) * sublane)  # keep (sublane, 128) legality
    if br >= rows:
        return rows                # whole array as one block (always legal)
    return br


def square(t: jax.Array, *, min_bytes: int = 1 << 20) -> jax.Array:
    """Elementwise square (torch.pow(t, 2)) via a Pallas TPU kernel.

    Inputs smaller than `min_bytes` go through plain XLA (t * t) — a kernel
    launch would be pure overhead there.  Larger inputs are streamed through a
    lane-dense, multi-MiB-tile Pallas pipeline.
    """
    orig_shape = t.shape
    dtype = jnp.dtype(t.dtype)
    n = t.size
    if n == 0 or n * dtype.itemsize < min_bytes:
        return t * t

    sublane = _sublane_min(dtype)
    rows, cols, n_pad = _pick_layout(n, sublane)

    flat = t.reshape(-1)
    if n_pad != n:                 # pad only when the shape truly requires it
        flat = jnp.pad(flat, (0, n_pad - n))
    x2d = flat.reshape(rows, cols)

    block_rows = _pick_block_rows(rows, cols, dtype.itemsize, sublane)
    grid = (pl.cdiv(rows, block_rows),)

    out2d = pl.pallas_call(
        _square_kernel,
        out_shape=jax.ShapeDtypeStruct((rows, cols), dtype),
        grid_spec=pltpu.PrefetchScalarGridSpec(
            num_scalar_prefetch=0,
            grid=grid,
            in_specs=[pl.BlockSpec((block_rows, cols), lambda i: (i, 0))],
            out_specs=pl.BlockSpec((block_rows, cols), lambda i: (i, 0)),
        ),
        compiler_params=pltpu.CompilerParams(
            dimension_semantics=("parallel",),
            vmem_limit_bytes=_VMEM_LIMIT_BYTES,
        ),
    )(x2d)

    out = out2d.reshape(-1)
    if n_pad != n:
        out = out[:n]
    return out.reshape(orig_shape)


if __name__ == "__main__":
    key = jax.random.PRNGKey(0)

    # Small NCHW-like input consistent with the module; force the Pallas path
    # (min_bytes=0) so the kernel itself is exercised and verified.
    x = jax.random.normal(key, (2, 4, 16, 16), dtype=jnp.float32)
    y = jax.block_until_ready(square(x, min_bytes=0))
    ref = x * x
    assert y.shape == x.shape and y.dtype == x.dtype
    assert jnp.array_equal(y, ref), "mismatch vs reference (small input)"

    # Larger tile-aligned input exercising the big-tile, multi-block pipeline
    # (4 MiB f32 -> wide 8192-lane slab, ~2 MiB blocks, 2-step parallel grid).
    x2 = jax.random.normal(key, (8, 32, 64, 64), dtype=jnp.float32)
    y2 = jax.block_until_ready(square(x2))
    assert jnp.array_equal(y2, x2 * x2), "mismatch vs reference (large input)"

    print("KERNEL_OK")
</pallas_src>

<mosaic_0001>
module attributes {stable_mosaic.version = 11 : i64} {
  func.func @_square_kernel(%arg0: i32, %arg1: memref<8x256xf32, #tpu.memory_space<vmem>>, %arg2: memref<8x256xf32, #tpu.memory_space<vmem>>) attributes {dimension_semantics = [#tpu.dimension_semantics<parallel>], iteration_bounds = array<i64: 1>, scalar_prefetch = 0 : i64, scratch_operands = 0 : i64, tpu.core_type = #tpu.core_type<tc>, window_params = [{transform_indices = @transform_0, window_bounds = array<i64: 8, 256>}, {transform_indices = @transform_1, window_bounds = array<i64: 8, 256>}]} {
    %c0 = arith.constant 0 : index
    %c0_0 = arith.constant 0 : index
    %0 = vector.load %arg1[%c0, %c0_0] : memref<8x256xf32, #tpu.memory_space<vmem>>, vector<8x256xf32>
    %1 = arith.mulf %0, %0 : vector<8x256xf32>
    %c0_1 = arith.constant 0 : index
    %c0_2 = arith.constant 0 : index
    %2 = vector.load %arg2[%c0_1, %c0_2] : memref<8x256xf32, #tpu.memory_space<vmem>>, vector<8x256xf32>
    tpu.vector_store %arg2[%c0_1, %c0_2], %1 {strides = array<i32>} : memref<8x256xf32, #tpu.memory_space<vmem>>, vector<8x256xf32>,
    return
  }
  func.func @transform_0(%arg0: i32) -> (i32, i32) {
    %c0_i32 = arith.constant 0 : i32
    %c0_i32_0 = arith.constant 0 : i32
    return %arg0, %c0_i32 : i32, i32
  }
  func.func @transform_1(%arg0: i32) -> (i32, i32) {
    %c0_i32 = arith.constant 0 : i32
    %c0_i32_0 = arith.constant 0 : i32
    return %arg0, %c0_i32 : i32, i32
  }
}

</mosaic_0001>

<llo_original>
// kernel: tpu_custom_call.1
$region0: #{tpu_custom_call.1}
  #allocation0 [shape = 'u32[]', space=smem, size = 0x4, offset = 0x4, fixed_abs, tag = 'smem constant byte address 0x4 - core index']
  #allocation1 [shape = 'u32[144,128]{1,0:T(1,128)}', space=vmem, size = 0x12000, scoped, tag = 'internal scratch']
  %s0 = inlined_call_operand.hbm [shape: f32[8,256], index: 0, kind: input, shape index: {}]
  %s1 = inlined_call_operand.hbm [shape: f32[8,256], index: 1, kind: output, shape index: {}]
  %s2 = sld [smem:[#allocation0]]
  $region18: #{tpu_custom_call.1} parent=0
    _
  %s4 = ssub.s32 1, %s2
  %s5 = scalar_select 0, %s4, %s2
  $region1: #{tpu_custom_call.1} parent=0
    #allocation2 [shape = 'u8[8192]{0}', space=vmem, size = 0x2000, scoped, tag = 'input window, operand 0, single buffered']
    #allocation3 [shape = 's32[1]{0}', space=sflag, size = 0x4, scoped, tag = 'scoped memory for tpu_custom_call.1']
    #allocation4 [shape = 's32[1]{0}', space=sflag, size = 0x4, scoped, tag = 'scoped memory for tpu_custom_call.1']
    #allocation5 [shape = 'u8[8192]{0}', space=vmem, size = 0x2000, scoped, tag = 'output window, operand 0, single buffered']
    %6 = vsyncpa [#allocation3], 0
    %7 = vsyncpa [#allocation4], 0
    // Predicated region
    $region2: #{tpu_custom_call.1} parent=1 // pred_check
      _
    $region3: #{tpu_custom_call.1} parent=1 // pred_check_branch
      %9 = sbr.rel (0) target = $region5
    $region4: #{tpu_custom_call.1} parent=1 // pred_region
      %s11 = ssub.s32 256, 256
      %12 = vsyncadd [#allocation3], %s11
      %s14 = sshll.u32 [#allocation2], 4
      %s15 = int_to_ptr.vmem [resolvable:$true] %s14
      %17 = dma.hbm_to_vmem [thread:$0]  %s0, 256, %s15, [#allocation3]
    $region5: #{tpu_custom_call.1} parent=1 // pred_fallthru
      _
    // Predicated region
    $region6: #{tpu_custom_call.1} parent=1 // pred_check
      _
    $region7: #{tpu_custom_call.1} parent=1 // pred_check_branch
      %19 = sbr.rel (0) target = $region9
    $region8: #{tpu_custom_call.1} parent=1 // pred_region
      %20 = dma.done [#allocation3], 256
    $region9: #{tpu_custom_call.1} parent=1 // pred_fallthru
      _
    %v21 = vld [vmem:[#allocation2] sm:$0xff]
    %v22 = vld [vmem:[#allocation2 + $0x8] sm:$0xff]
    %v23 = vmul.f32 %v21, %v21
    %v24 = vmul.f32 %v22, %v22
    %25 = vst [vmem:[#allocation5] sm:$0xff] %v23
    %26 = vst [vmem:[#allocation5 + $0x8] sm:$0xff] %v24
    // Predicated region
    $region10: #{tpu_custom_call.1} parent=1 // pred_check
      _
    $region11: #{tpu_custom_call.1} parent=1 // pred_check_branch
      %28 = sbr.rel (0) target = $region13
    $region12: #{tpu_custom_call.1} parent=1 // pred_region
      %s30 = ssub.s32 256, 256
      %31 = vsyncadd [#allocation4], %s30
      %s33 = sshll.u32 [#allocation5], 4
      %s34 = int_to_ptr.vmem [resolvable:$true] %s33
      %36 = dma.vmem_to_hbm [thread:$0]  %s34, 256, %s1, [#allocation4]
    $region13: #{tpu_custom_call.1} parent=1 // pred_fallthru
      _
    // Predicated region
    $region14: #{tpu_custom_call.1} parent=1 // pred_check
      _
    $region15: #{tpu_custom_call.1} parent=1 // pred_check_branch
      %38 = sbr.rel (0) target = $region17
    $region16: #{tpu_custom_call.1} parent=1 // pred_region
      %39 = dma.done [#allocation4], 256
    $region17: #{tpu_custom_call.1} parent=1 // pred_fallthru
      _
    %40 = vsyncpa [#allocation3], 1
    %41 = vsyncpa [#allocation4], 1

</llo_original>
